<compile_context>
chip_gen: v7x
topology: tpu7x:2x2x1
jax: 0.10.0
libtpu: 0.0.40
codegen_flags: <defaults>
</compile_context>

<pallas_src>
import math
import functools

import jax
import jax.numpy as jnp
from jax import lax
from jax.experimental import pallas as pl
from jax.experimental.pallas import tpu as pltpu


_VMEM_TILE_BUDGET = 48 * 1024 * 1024   # leave headroom under v7x's 64 MiB


def _gelu_exact(x):
    # Matches torch.nn.GELU() default (erf formulation).
    return 0.5 * x * (1.0 + lax.erf(x * (1.0 / math.sqrt(2.0))))


def _dropout(x, rate):
    """Inverted dropout using the stateful TPU PRNG (seed set by caller)."""
    bits = pltpu.bitcast(pltpu.prng_random_bits(x.shape), jnp.uint32)
    keep_prob = 1.0 - rate
    # NOTE: int(keep_prob * (2**32 - 1)) has a sub-1e-9 bias in keep prob —
    # negligible for dropout.
    threshold = jnp.uint32(int(keep_prob * (2 ** 32 - 1)))
    keep = bits < threshold
    return jnp.where(keep, x * (1.0 / keep_prob), jnp.zeros_like(x))


def mlp_kernel(seed_ref, x_ref, w1_ref, b1_ref, w2_ref, b2_ref, o_ref,
               acc_ref, *, dropout_rate, training):
    j = pl.program_id(1)
    nj = pl.num_programs(1)

    @pl.when(j == 0)
    def _():
        acc_ref[...] = jnp.zeros_like(acc_ref)

    if training and dropout_rate > 0.0:
        # One seed per grid step; the stateful stream advances between the
        # fc1-dropout and fc2-dropout draws, so the two masks are independent.
        pltpu.prng_seed(seed_ref[0] + pl.program_id(0) * nj + j)

    x = x_ref[...]  # native dtype straight into the MXU

    # fc1 chunk: [tm, tmlp], f32 accumulation on the MXU.
    h = jnp.dot(x, w1_ref[...], preferred_element_type=jnp.float32)
    h = h + b1_ref[...].astype(jnp.float32)
    h = _gelu_exact(h)
    if training and dropout_rate > 0.0:
        h = _dropout(h, dropout_rate)

    # fc2 partial product, accumulated over mlp_dim chunks in f32 scratch.
    acc_ref[...] += jnp.dot(h.astype(x.dtype), w2_ref[...],
                            preferred_element_type=jnp.float32)

    @pl.when(j == nj - 1)
    def _():
        y = acc_ref[...] + b2_ref[...].astype(jnp.float32)
        if training and dropout_rate > 0.0:
            y = _dropout(y, dropout_rate)
        o_ref[...] = y.astype(o_ref.dtype)


def _vmem_need_bytes(tm, in_dim, tmlp, out_pad, itemsize):
    # Double-buffered pipeline tiles (x, w1, b1, w2, b2, out) + f32 scratch.
    tiles = (tm * in_dim + in_dim * tmlp + tmlp
             + tmlp * out_pad + out_pad + tm * out_pad)
    return 2 * tiles * itemsize + tm * out_pad * 4


def _choose_tiles(n, in_dim, mlp_dim, out_pad, itemsize):
    # Row tile: bigger for narrower dtypes; must evenly divide n (else full n).
    if itemsize <= 2:
        row_cands = (1024, 512, 256, 128, 64, 32, 16, 8)
    else:
        row_cands = (512, 256, 128, 64, 32, 16, 8)
    row_cands = [c for c in row_cands if n % c == 0] or [n]
    # mlp_dim chunk: multiples of 256 to feed the 2x256x256 MXU on v6e/v7x.
    mlp_cands = [c for c in (1024, 512, 256) if mlp_dim % c == 0] or [mlp_dim]
    for tm in row_cands:
        for tmlp in mlp_cands:
            if _vmem_need_bytes(tm, in_dim, tmlp, out_pad, itemsize) \
                    <= _VMEM_TILE_BUDGET:
                return tm, tmlp
    return row_cands[-1], mlp_cands[-1]


def mlp_block(x, w1, b1, w2, b2, *, dropout_rate=0.1, training=False, seed=0):
    """x: [N, in_dim]; w1: [in_dim, mlp_dim]; w2: [mlp_dim, out_dim].
    Returns [N, out_dim]."""
    n, in_dim = x.shape
    mlp_dim = w1.shape[1]
    out_dim = w2.shape[1]

    # Lane-dense output: pad out_dim to a multiple of 128 (zero weight/bias
    # columns) so stores are unmasked; slice back afterwards.
    out_pad = max(128, ((out_dim + 127) // 128) * 128)
    if out_pad != out_dim:
        w2 = jnp.pad(w2, ((0, 0), (0, out_pad - out_dim)))
        b2 = jnp.pad(b2, ((0, 0), (0, out_pad - out_dim)))

    itemsize = jnp.dtype(x.dtype).itemsize
    tm, tmlp = _choose_tiles(n, in_dim, mlp_dim, out_pad, itemsize)
    assert n % tm == 0 and mlp_dim % tmlp == 0

    need = _vmem_need_bytes(tm, in_dim, tmlp, out_pad, itemsize)
    vmem_limit = min(max(int(1.5 * need) + (2 << 20), 16 << 20), 64 << 20)

    seed_arr = jnp.array([seed], dtype=jnp.int32)

    kernel = functools.partial(mlp_kernel,
                               dropout_rate=dropout_rate,
                               training=training)

    out = pl.pallas_call(
        kernel,
        out_shape=jax.ShapeDtypeStruct((n, out_pad), x.dtype),
        grid_spec=pltpu.PrefetchScalarGridSpec(
            num_scalar_prefetch=1,                    # seed -> SMEM
            grid=(n // tm, mlp_dim // tmlp),          # (rows, mlp chunks)
            in_specs=[
                pl.BlockSpec((tm, in_dim), lambda i, j, seed: (i, 0)),    # x
                pl.BlockSpec((in_dim, tmlp), lambda i, j, seed: (0, j)),  # w1
                pl.BlockSpec((1, tmlp), lambda i, j, seed: (0, j)),       # b1
                pl.BlockSpec((tmlp, out_pad), lambda i, j, seed: (j, 0)), # w2
                pl.BlockSpec((1, out_pad), lambda i, j, seed: (0, 0)),    # b2
            ],
            out_specs=pl.BlockSpec((tm, out_pad), lambda i, j, seed: (i, 0)),
            scratch_shapes=[pltpu.VMEM((tm, out_pad), jnp.float32)],
        ),
        compiler_params=pltpu.CompilerParams(
            dimension_semantics=("parallel", "arbitrary"),
            vmem_limit_bytes=vmem_limit),
    )(seed_arr, x, w1, b1, w2, b2)

    if out_pad != out_dim:
        out = out[:, :out_dim]
    return out


def init_params(key, in_dim, mlp_dim, out_dim, dtype=jnp.float32):
    """Deterministic nn.Linear-style init (uniform +/- 1/sqrt(fan_in))."""
    k1, k2, k3, k4 = jax.random.split(key, 4)
    lim1 = 1.0 / math.sqrt(in_dim)
    lim2 = 1.0 / math.sqrt(mlp_dim)
    w1 = jax.random.uniform(k1, (in_dim, mlp_dim), dtype, -lim1, lim1)
    b1 = jax.random.uniform(k2, (1, mlp_dim), dtype, -lim1, lim1)
    w2 = jax.random.uniform(k3, (mlp_dim, out_dim), dtype, -lim2, lim2)
    b2 = jax.random.uniform(k4, (1, out_dim), dtype, -lim2, lim2)
    return w1, b1, w2, b2


if __name__ == "__main__":
    key = jax.random.PRNGKey(0)
    kx, kp = jax.random.split(key)

    batch, seq = 2, 8
    in_dim, mlp_dim, out_dim = 32, 64, 32

    x = jax.random.normal(kx, (batch, seq, in_dim), dtype=jnp.float32)
    w1, b1, w2, b2 = init_params(kp, in_dim, mlp_dim, out_dim)

    # Flatten tokens into rows for the kernel, restore shape after.
    x2d = x.reshape(batch * seq, in_dim)
    out2d = mlp_block(x2d, w1, b1, w2, b2,
                      dropout_rate=0.1, training=False)  # eval: dropout = id
    out = out2d.reshape(batch, seq, out_dim)
    jax.block_until_ready(out)

    # Reference check in plain JAX (eval mode).
    h_ref = _gelu_exact(x2d @ w1 + b1)
    ref = (h_ref @ w2 + b2).reshape(batch, seq, out_dim)
    assert jnp.allclose(out, ref, atol=1e-5, rtol=1e-5)

    print("KERNEL_OK")
</pallas_src>

<mosaic_0001>
module attributes {stable_mosaic.version = 11 : i64} {
  func.func @mlp_kernel(%arg0: i32, %arg1: i32, %arg2: memref<1xi32, #tpu.memory_space<smem>>, %arg3: memref<16x32xf32, #tpu.memory_space<vmem>>, %arg4: memref<32x64xf32, #tpu.memory_space<vmem>>, %arg5: memref<1x64xf32, #tpu.memory_space<vmem>>, %arg6: memref<64x128xf32, #tpu.memory_space<vmem>>, %arg7: memref<1x128xf32, #tpu.memory_space<vmem>>, %arg8: memref<16x128xf32, #tpu.memory_space<vmem>>, %arg9: memref<16x128xf32, #tpu.memory_space<vmem>>) attributes {dimension_semantics = [#tpu.dimension_semantics<parallel>, #tpu.dimension_semantics<arbitrary>], iteration_bounds = array<i64: 1, 1>, scalar_prefetch = 1 : i64, scratch_operands = 1 : i64, tpu.core_type = #tpu.core_type<tc>, window_params = [{transform_indices = @transform_0, window_bounds = array<i64: 16, 32>}, {transform_indices = @transform_1, window_bounds = array<i64: 32, 64>}, {transform_indices = @transform_2, window_bounds = array<i64: 1, 64>}, {transform_indices = @transform_3, window_bounds = array<i64: 64, 128>}, {pipeline_mode = #tpu.pipeline_mode<synchronous>, transform_indices = @transform_4, window_bounds = array<i64: 1, 128>}, {transform_indices = @transform_5, window_bounds = array<i64: 16, 128>}]} {
    %c0_i32 = arith.constant 0 : i32
    %0 = arith.cmpi eq, %arg1, %c0_i32 : i32
    %1 = arith.extui %0 : i1 to i32
    %c0_i32_0 = arith.constant 0 : i32
    %2 = arith.cmpi ne, %1, %c0_i32_0 : i32
    scf.if %2 {
      %cst_18 = arith.constant 0.000000e+00 : f32
      %25 = vector.broadcast %cst_18 : f32 to vector<16x128xf32>
      %c0_19 = arith.constant 0 : index
      %c0_20 = arith.constant 0 : index
      %26 = vector.load %arg9[%c0_19, %c0_20] : memref<16x128xf32, #tpu.memory_space<vmem>>, vector<16x128xf32>
      tpu.vector_store %arg9[%c0_19, %c0_20], %25 {strides = array<i32>} : memref<16x128xf32, #tpu.memory_space<vmem>>, vector<16x128xf32>,
    } else {
    }
    %c0 = arith.constant 0 : index
    %c0_1 = arith.constant 0 : index
    %3 = vector.load %arg3[%c0, %c0_1] : memref<16x32xf32, #tpu.memory_space<vmem>>, vector<16x32xf32>
    %c0_2 = arith.constant 0 : index
    %c0_3 = arith.constant 0 : index
    %4 = vector.load %arg4[%c0_2, %c0_3] : memref<32x64xf32, #tpu.memory_space<vmem>>, vector<32x64xf32>
    %cst = arith.constant dense<0.000000e+00> : vector<16x64xf32>
    %5 = tpu.matmul %3, %4, %cst {dimension_numbers = #tpu.dot_dimension_numbers<[1], [0], [0], [1], [0, 0, 1, 1], [], []>} : vector<16x32xf32>, vector<32x64xf32>, vector<16x64xf32> -> vector<16x64xf32>
    %c0_4 = arith.constant 0 : index
    %c0_5 = arith.constant 0 : index
    %6 = vector.load %arg5[%c0_4, %c0_5] : memref<1x64xf32, #tpu.memory_space<vmem>>, vector<1x64xf32>
    %7 = vector.broadcast %6 : vector<1x64xf32> to vector<16x64xf32>
    %8 = arith.addf %5, %7 : vector<16x64xf32>
    %cst_6 = arith.constant 5.000000e-01 : f32
    %9 = vector.broadcast %cst_6 : f32 to vector<16x64xf32>
    %10 = arith.mulf %9, %8 : vector<16x64xf32>
    %cst_7 = arith.constant 0.707106769 : f32
    %11 = vector.broadcast %cst_7 : f32 to vector<16x64xf32>
    %12 = arith.mulf %8, %11 : vector<16x64xf32>
    %13 = math.erf %12 : vector<16x64xf32>
    %cst_8 = arith.constant 1.000000e+00 : f32
    %14 = vector.broadcast %cst_8 : f32 to vector<16x64xf32>
    %15 = arith.addf %14, %13 : vector<16x64xf32>
    %16 = arith.mulf %10, %15 : vector<16x64xf32>
    %c0_9 = arith.constant 0 : index
    %c0_10 = arith.constant 0 : index
    %17 = vector.load %arg9[%c0_9, %c0_10] : memref<16x128xf32, #tpu.memory_space<vmem>>, vector<16x128xf32>
    %c0_11 = arith.constant 0 : index
    %c0_12 = arith.constant 0 : index
    %18 = vector.load %arg6[%c0_11, %c0_12] : memref<64x128xf32, #tpu.memory_space<vmem>>, vector<64x128xf32>
    %cst_13 = arith.constant dense<0.000000e+00> : vector<16x128xf32>
    %19 = tpu.matmul %16, %18, %cst_13 {dimension_numbers = #tpu.dot_dimension_numbers<[1], [0], [0], [1], [0, 0, 1, 1], [], []>} : vector<16x64xf32>, vector<64x128xf32>, vector<16x128xf32> -> vector<16x128xf32>
    %20 = arith.addf %17, %19 : vector<16x128xf32>
    %c0_14 = arith.constant 0 : index
    %c0_15 = arith.constant 0 : index
    %21 = vector.load %arg9[%c0_14, %c0_15] : memref<16x128xf32, #tpu.memory_space<vmem>>, vector<16x128xf32>
    tpu.vector_store %arg9[%c0_14, %c0_15], %20 {strides = array<i32>} : memref<16x128xf32, #tpu.memory_space<vmem>>, vector<16x128xf32>,
    %c0_i32_16 = arith.constant 0 : i32
    %22 = arith.cmpi eq, %arg1, %c0_i32_16 : i32
    %23 = arith.extui %22 : i1 to i32
    %c0_i32_17 = arith.constant 0 : i32
    %24 = arith.cmpi ne, %23, %c0_i32_17 : i32
    scf.if %24 {
      %c0_18 = arith.constant 0 : index
      %c0_19 = arith.constant 0 : index
      %25 = vector.load %arg9[%c0_18, %c0_19] : memref<16x128xf32, #tpu.memory_space<vmem>>, vector<16x128xf32>
      %c0_20 = arith.constant 0 : index
      %c0_21 = arith.constant 0 : index
      %26 = vector.load %arg7[%c0_20, %c0_21] : memref<1x128xf32, #tpu.memory_space<vmem>>, vector<1x128xf32>
      %27 = vector.broadcast %26 : vector<1x128xf32> to vector<16x128xf32>
      %28 = arith.addf %25, %27 : vector<16x128xf32>
      %c0_22 = arith.constant 0 : index
      %c0_23 = arith.constant 0 : index
      %29 = vector.load %arg8[%c0_22, %c0_23] : memref<16x128xf32, #tpu.memory_space<vmem>>, vector<16x128xf32>
      tpu.vector_store %arg8[%c0_22, %c0_23], %28 {strides = array<i32>} : memref<16x128xf32, #tpu.memory_space<vmem>>, vector<16x128xf32>,
    } else {
    }
    return
  }
  func.func @transform_0(%arg0: i32, %arg1: i32, %arg2: memref<1xi32, #tpu.memory_space<smem>>) -> (i32, i32) {
    %c0_i32 = arith.constant 0 : i32
    %c0_i32_0 = arith.constant 0 : i32
    return %arg0, %c0_i32 : i32, i32
  }
  func.func @transform_1(%arg0: i32, %arg1: i32, %arg2: memref<1xi32, #tpu.memory_space<smem>>) -> (i32, i32) {
    %c0_i32 = arith.constant 0 : i32
    %c0_i32_0 = arith.constant 0 : i32
    return %c0_i32, %arg1 : i32, i32
  }
  func.func @transform_2(%arg0: i32, %arg1: i32, %arg2: memref<1xi32, #tpu.memory_space<smem>>) -> (i32, i32) {
    %c0_i32 = arith.constant 0 : i32
    %c0_i32_0 = arith.constant 0 : i32
    return %c0_i32, %arg1 : i32, i32
  }
  func.func @transform_3(%arg0: i32, %arg1: i32, %arg2: memref<1xi32, #tpu.memory_space<smem>>) -> (i32, i32) {
    %c0_i32 = arith.constant 0 : i32
    %c0_i32_0 = arith.constant 0 : i32
    return %arg1, %c0_i32 : i32, i32
  }
  func.func @transform_4(%arg0: i32, %arg1: i32, %arg2: memref<1xi32, #tpu.memory_space<smem>>) -> (i32, i32) {
    %c0_i32 = arith.constant 0 : i32
    %c0_i32_0 = arith.constant 0 : i32
    %c0_i32_1 = arith.constant 0 : i32
    return %c0_i32, %c0_i32_0 : i32, i32
  }
  func.func @transform_5(%arg0: i32, %arg1: i32, %arg2: memref<1xi32, #tpu.memory_space<smem>>) -> (i32, i32) {
    %c0_i32 = arith.constant 0 : i32
    %c0_i32_0 = arith.constant 0 : i32
    return %arg0, %c0_i32 : i32, i32
  }
}

</mosaic_0001>

<llo_original>
// kernel: tpu_custom_call.1
$region0: #{tpu_custom_call.1}
  #allocation0 [shape = 'u32[]', space=smem, size = 0x4, offset = 0x4, fixed_abs, tag = 'smem constant byte address 0x4 - core index']
  #allocation1 [shape = 'u32[144,128]{1,0:T(1,128)}', space=vmem, size = 0x12000, scoped, tag = 'internal scratch']
  #allocation2 [shape = 'f32[16,128]{1,0:T(8,128)}', space=vmem, size = 0x2000, scoped, tag = 'scratch operand']
  #allocation3 [shape = 's32[1]{0}', space=sflag, size = 0x4, scoped, tag = 'scoped memory for tpu_custom_call.1']
  #allocation4 [shape = 's32[1]{0:T(128)S(6)}', space=smem, size = 0x200, scoped, tag = 'prefetched SMEM operand 0']
  %s0 = inlined_call_operand.<no memory space> [shape: s32[1], index: 0, kind: input, shape index: {}]
  %s1 = inlined_call_operand.hbm [shape: f32[16,32], index: 1, kind: input, shape index: {}]
  %s2 = inlined_call_operand.hbm [shape: f32[32,64], index: 2, kind: input, shape index: {}]
  %s3 = inlined_call_operand.vmem [shape: f32[1,64], index: 3, kind: input, shape index: {}]
  %s4 = inlined_call_operand.hbm [shape: f32[64,128], index: 4, kind: input, shape index: {}]
  %s5 = inlined_call_operand.vmem [shape: f32[1,128], index: 5, kind: input, shape index: {}]
  %s6 = inlined_call_operand.hbm [shape: f32[16,128], index: 6, kind: output, shape index: {}]
  %s7 = sld [smem:[#allocation0]]
  $region50: #{tpu_custom_call.1} parent=0
    _
  %s9 = ssub.s32 1, %s7
  %s10 = scalar_select 0, %s9, %s7
  %11 = sst [smem:[#allocation4]] %s0
  $region1: #{tpu_custom_call.1} parent=0
    #allocation5 [shape = 'u8[8192]{0}', space=vmem, size = 0x2000, scoped, tag = 'input window, operand 1, single buffered']
    #allocation6 [shape = 's32[1]{0}', space=sflag, size = 0x4, scoped, tag = 'scoped memory for tpu_custom_call.1']
    #allocation7 [shape = 's32[1]{0}', space=sflag, size = 0x4, scoped, tag = 'scoped memory for tpu_custom_call.1']
    #allocation8 [shape = 'u8[16384]{0}', space=vmem, size = 0x4000, scoped, tag = 'input window, operand 2, single buffered']
    #allocation9 [shape = 's32[1]{0}', space=sflag, size = 0x4, scoped, tag = 'scoped memory for tpu_custom_call.1']
    #allocation10 [shape = 'u8[32768]{0}', space=vmem, size = 0x8000, scoped, tag = 'input window, operand 4, single buffered']
    #allocation11 [shape = 'u8[8192]{0}', space=vmem, size = 0x2000, scoped, tag = 'output window, operand 0, single buffered']
    %12 = vsyncpa [#allocation6], 0
    %13 = vsyncpa [#allocation9], 0
    %14 = vsyncpa [#allocation7], 0
    // Predicated region
    $region2: #{tpu_custom_call.1} parent=1 // pred_check
      _
    $region3: #{tpu_custom_call.1} parent=1 // pred_check_branch
      %16 = sbr.rel (0) target = $region5
    $region4: #{tpu_custom_call.1} parent=1 // pred_region
      %s18 = ssub.s32 256, 256
      %19 = vsyncadd [#allocation6], %s18
      %s20 = sshll.u32 [#allocation5], 4
      %s21 = int_to_ptr.vmem [resolvable:$true] %s20
      %26 = dma.hbm_to_vmem [thread:$0]  %s1, 256, %s21, [#allocation6], 128, 128, 8
    $region5: #{tpu_custom_call.1} parent=1 // pred_fallthru
      _
    // Predicated region
    $region6: #{tpu_custom_call.1} parent=1 // pred_check
      _
    $region7: #{tpu_custom_call.1} parent=1 // pred_check_branch
      %28 = sbr.rel (0) target = $region9
    $region8: #{tpu_custom_call.1} parent=1 // pred_region
      %s30 = ssub.s32 512, 512
      %31 = vsyncadd [#allocation9], %s30
      %s32 = sshll.u32 [#allocation8], 4
      %s33 = int_to_ptr.vmem [resolvable:$true] %s32
      %38 = dma.hbm_to_vmem [thread:$0]  %s2, 512, %s33, [#allocation9], 128, 128, 8
    $region9: #{tpu_custom_call.1} parent=1 // pred_fallthru
      _
    // Predicated region
    $region10: #{tpu_custom_call.1} parent=1 // pred_check
      _
    $region11: #{tpu_custom_call.1} parent=1 // pred_check_branch
      %40 = sbr.rel (0) target = $region13
    $region12: #{tpu_custom_call.1} parent=1 // pred_region
      _
    $region13: #{tpu_custom_call.1} parent=1 // pred_fallthru
      _
    // Predicated region
    $region14: #{tpu_custom_call.1} parent=1 // pred_check
      _
    $region15: #{tpu_custom_call.1} parent=1 // pred_check_branch
      %42 = sbr.rel (0) target = $region17
    $region16: #{tpu_custom_call.1} parent=1 // pred_region
      %s44 = ssub.s32 1024, 1024
      %45 = vsyncadd [#allocation9], %s44
      %s46 = sshll.u32 [#allocation10], 4
      %s47 = int_to_ptr.vmem [resolvable:$true] %s46
      %52 = dma.hbm_to_vmem [thread:$0]  %s4, 1024, %s47, [#allocation9], 128, 128, 8
    $region17: #{tpu_custom_call.1} parent=1 // pred_fallthru
      _
    // Predicated region
    $region18: #{tpu_custom_call.1} parent=1 // pred_check
      _
    $region19: #{tpu_custom_call.1} parent=1 // pred_check_branch
      %54 = sbr.rel (0) target = $region21
    $region20: #{tpu_custom_call.1} parent=1 // pred_region
      _
    $region21: #{tpu_custom_call.1} parent=1 // pred_fallthru
      _
    // Predicated region
    $region22: #{tpu_custom_call.1} parent=1 // pred_check
      _
    $region23: #{tpu_custom_call.1} parent=1 // pred_check_branch
      %56 = sbr.rel (0) target = $region25
    $region24: #{tpu_custom_call.1} parent=1 // pred_region
      %57 = dma.done [#allocation6], 256
    $region25: #{tpu_custom_call.1} parent=1 // pred_fallthru
      _
    // Predicated region
    $region26: #{tpu_custom_call.1} parent=1 // pred_check
      _
    $region27: #{tpu_custom_call.1} parent=1 // pred_check_branch
      %59 = sbr.rel (0) target = $region29
    $region28: #{tpu_custom_call.1} parent=1 // pred_region
      %60 = dma.done [#allocation9], 512
    $region29: #{tpu_custom_call.1} parent=1 // pred_fallthru
      _
    // Predicated region
    $region30: #{tpu_custom_call.1} parent=1 // pred_check
      _
    $region31: #{tpu_custom_call.1} parent=1 // pred_check_branch
      %62 = sbr.rel (0) target = $region33
    $region32: #{tpu_custom_call.1} parent=1 // pred_region
      %63 = dma.done [#allocation9], 1024
    $region33: #{tpu_custom_call.1} parent=1 // pred_fallthru
      _
    %p64 = scmp.eq.s32.totalorder 0, 0
    // Predicated region
    $region34: #{tpu_custom_call.1} parent=1 // pred_check
      %p65 = pneg %p64
    $region35: #{tpu_custom_call.1} parent=1 // pred_check_branch
      %67 = sbr.rel (%p65) target = $region37
    $region36: #{tpu_custom_call.1} parent=1 // pred_region
      %68 = vst [vmem:[#allocation2] sm:$0xff] 0.0
      %69 = vst [vmem:[#allocation2 + $0x8] sm:$0xff] 0.0
    $region37: #{tpu_custom_call.1} parent=1 // pred_fallthru
      _
    %v70 = vld [vmem:[#allocation5] sm:$0xff]
    %v71 = vld [vmem:[#allocation5 + $0x8] sm:$0xff]
    %v72 = vld [vmem:[#allocation8] sm:$0xff]
    %v73 = vld [vmem:[#allocation8 + $0x8] sm:$0xff]
    %v74 = vld [vmem:[#allocation8 + $0x10] sm:$0xff]
    %v75 = vld [vmem:[#allocation8 + $0x18] sm:$0xff]
    %v76 = vld [vmem:[%s3] sm:$0x1]
    %v78 = vlaneseq
    %v79 = vshrl.u32 %v78, 7
    %v80 = vsub.s32 0, %v79
    %v81 = vrot.slane %v76, %v80
    %vm83 = vcmask 261120
    %v85 = vsel %vm83, %v70, 0
    %v88 = vsel %vm83, %v71, 0
    %90 = vmatprep.subr.mxu0 0.0
    %91 = vmatpush1.msra.mxu0 %v72
    %92 = vmatprep.subr.mxu0 0.0
    %93 = vmatpush1.msra.mxu0 %v73
    %94 = vmatprep.subr.mxu0 0.0
    %95 = vmatpush1.msra.mxu0 %v74
    %96 = vmatprep.subr.mxu0 0.0
    %97 = vmatpush1.msra.mxu0 %v75
    %98 = vmatprep.subr.mxu0 0.0
    %99 = vmatpush1.msra.mxu0 0.0
    %100 = vmatprep.subr.mxu0 0.0
    %101 = vmatpush1.msra.mxu0 0.0
    %102 = vmatprep.subr.mxu0 0.0
    %103 = vmatpush1.msra.mxu0 0.0
    %104 = vmatprep.subr.mxu0 0.0
    %105 = vmatpush1.msra.mxu0 0.0
    %106 = vmatprep.subr.mxu0 0.0
    %107 = vmatpush1.msra.mxu0 0.0
    %108 = vmatprep.subr.mxu0 0.0
    %109 = vmatpush1.msra.mxu0 0.0
    %110 = vmatprep.subr.mxu0 0.0
    %111 = vmatpush1.msra.mxu0 0.0
    %112 = vmatprep.subr.mxu0 0.0
    %113 = vmatpush1.msra.mxu0 0.0
    %114 = vmatprep.subr.mxu0 0.0
    %115 = vmatpush1.msra.mxu0 0.0
    %116 = vmatprep.subr.mxu0 0.0
    %117 = vmatpush1.msra.mxu0 0.0
    %118 = vmatprep.subr.mxu0 0.0
    %119 = vmatpush1.msra.mxu0 0.0
    %120 = vmatprep.subr.mxu0 0.0
    %121 = vmatpush1.msra.mxu0 0.0
    %122 = vmatprep.subr.mxu0 0.0
    %123 = vmatpush1.msra.mxu0 0.0
    %124 = vmatprep.subr.mxu0 0.0
    %125 = vmatpush1.msra.mxu0 0.0
    %126 = vmatprep.subr.mxu0 0.0
    %127 = vmatpush1.msra.mxu0 0.0
    %128 = vmatprep.subr.mxu0 0.0
    %129 = vmatpush1.msra.mxu0 0.0
    %130 = vmatprep.subr.mxu0 0.0
    %131 = vmatpush1.msra.mxu0 0.0
    %132 = vmatprep.subr.mxu0 0.0
    %133 = vmatpush1.msra.mxu0 0.0
    %134 = vmatprep.subr.mxu0 0.0
    %135 = vmatpush1.msra.mxu0 0.0
    %136 = vmatprep.subr.mxu0 0.0
    %137 = vmatpush1.msra.mxu0 0.0
    %138 = vmatprep.subr.mxu0 0.0
    %139 = vmatpush1.msra.mxu0 0.0
    %140 = vmatprep.subr.mxu0 0.0
    %141 = vmatpush1.msra.mxu0 0.0
    %142 = vmatprep.subr.mxu0 0.0
    %143 = vmatpush1.msra.mxu0 0.0
    %144 = vmatprep.subr.mxu0 0.0
    %145 = vmatpush1.msra.mxu0 0.0
    %146 = vmatprep.subr.mxu0 0.0
    %147 = vmatpush1.msra.mxu0 0.0
    %148 = vmatprep.subr.mxu0 0.0
    %149 = vmatpush1.msra.mxu0 0.0
    %150 = vmatprep.subr.mxu0 0.0
    %151 = vmatpush1.msra.mxu0 0.0
    %152 = vmatprep.subr.mxu0 0.0
    %153 = vmatpush1.msra.mxu0 0.0
    %154 = vmatprep.mubr.f32.mxu0 0.0
    %155 = vmatmul.mubr.f32.gmra.mrb[0].mxu0 %v85
    %v156 = vpop.f32.mrb[0].mxu0
    %v157 = vadd.f32 %v81, %v156
    %v158 = vpop.f32.mrb[0].mxu0
    %159 = vmatprep.mubr.f32.mxu0 0.0
    %160 = vmatmul.mubr.f32.gmra.mrb[0].mxu0 %v88
    %v161 = vpop.f32.mrb[0].mxu0
    %v162 = vadd.f32 %v81, %v161
    %v163 = vpop.f32.mrb[0].mxu0
    %164 = vdwg.mxu0
    %v165 = vmul.f32 %v157, 0.5
    %v166 = vmul.f32 %v162, 0.5
    %v167 = vmul.f32 %v157, 0.70710677
    %v168 = vmul.f32 %v162, 0.70710677
    %v169 = verf.f32.pop %v167
    %v170 = verf.f32.pop %v168
    %v171 = vadd.f32 %v169, 1.0
    %v172 = vadd.f32 %v170, 1.0
    %v173 = vmul.f32 %v165, %v171
    %v174 = vmul.f32 %v166, %v172
    %v175 = vld [vmem:[#allocation2] sm:$0xff]
    %v176 = vld [vmem:[#allocation2 + $0x8] sm:$0xff]
    %v177 = vld [vmem:[#allocation10] sm:$0xff]
    %v178 = vld [vmem:[#allocation10 + $0x8] sm:$0xff]
    %v179 = vld [vmem:[#allocation10 + $0x10] sm:$0xff]
    %v180 = vld [vmem:[#allocation10 + $0x18] sm:$0xff]
    %v181 = vld [vmem:[#allocation10 + $0x20] sm:$0xff]
    %v182 = vld [vmem:[#allocation10 + $0x28] sm:$0xff]
    %v183 = vld [vmem:[#allocation10 + $0x30] sm:$0xff]
    %v184 = vld [vmem:[#allocation10 + $0x38] sm:$0xff]
    %vm185 = vcmask 523264
    %v187 = vsel %vm185, %v173, 0
    %v190 = vsel %vm185, %v174, 0
    %192 = vmatprep.subr.mxu0 0.0
    %193 = vmatpush1.msra.mxu0 %v177
    %194 = vmatprep.subr.mxu0 0.0
    %195 = vmatpush1.msra.mxu0 %v178
    %196 = vmatprep.subr.mxu0 0.0
    %197 = vmatpush1.msra.mxu0 %v179
    %198 = vmatprep.subr.mxu0 0.0
    %199 = vmatpush1.msra.mxu0 %v180
    %200 = vmatprep.subr.mxu0 0.0
    %201 = vmatpush1.msra.mxu0 %v181
    %202 = vmatprep.subr.mxu0 0.0
    %203 = vmatpush1.msra.mxu0 %v182
    %204 = vmatprep.subr.mxu0 0.0
    %205 = vmatpush1.msra.mxu0 %v183
    %206 = vmatprep.subr.mxu0 0.0
    %207 = vmatpush1.msra.mxu0 %v184
    %208 = vmatprep.subr.mxu0 0.0
    %209 = vmatpush1.msra.mxu0 0.0
    %210 = vmatprep.subr.mxu0 0.0
    %211 = vmatpush1.msra.mxu0 0.0
    %212 = vmatprep.subr.mxu0 0.0
    %213 = vmatpush1.msra.mxu0 0.0
    %214 = vmatprep.subr.mxu0 0.0
    %215 = vmatpush1.msra.mxu0 0.0
    %216 = vmatprep.subr.mxu0 0.0
    %217 = vmatpush1.msra.mxu0 0.0
    %218 = vmatprep.subr.mxu0 0.0
    %219 = vmatpush1.msra.mxu0 0.0
    %220 = vmatprep.subr.mxu0 0.0
    %221 = vmatpush1.msra.mxu0 0.0
    %222 = vmatprep.subr.mxu0 0.0
    %223 = vmatpush1.msra.mxu0 0.0
    %224 = vmatprep.subr.mxu0 0.0
    %225 = vmatpush1.msra.mxu0 0.0
    %226 = vmatprep.subr.mxu0 0.0
    %227 = vmatpush1.msra.mxu0 0.0
    %228 = vmatprep.subr.mxu0 0.0
    %229 = vmatpush1.msra.mxu0 0.0
    %230 = vmatprep.subr.mxu0 0.0
    %231 = vmatpush1.msra.mxu0 0.0
    %232 = vmatprep.subr.mxu0 0.0
    %233 = vmatpush1.msra.mxu0 0.0
    %234 = vmatprep.subr.mxu0 0.0
    %235 = vmatpush1.msra.mxu0 0.0
    %236 = vmatprep.subr.mxu0 0.0
    %237 = vmatpush1.msra.mxu0 0.0
    %238 = vmatprep.subr.mxu0 0.0
    %239 = vmatpush1.msra.mxu0 0.0
    %240 = vmatprep.subr.mxu0 0.0
    %241 = vmatpush1.msra.mxu0 0.0
    %242 = vmatprep.subr.mxu0 0.0
    %243 = vmatpush1.msra.mxu0 0.0
    %244 = vmatprep.subr.mxu0 0.0
    %245 = vmatpush1.msra.mxu0 0.0
    %246 = vmatprep.subr.mxu0 0.0
    %247 = vmatpush1.msra.mxu0 0.0
    %248 = vmatprep.subr.mxu0 0.0
    %249 = vmatpush1.msra.mxu0 0.0
    %250 = vmatprep.subr.mxu0 0.0
    %251 = vmatpush1.msra.mxu0 0.0
    %252 = vmatprep.subr.mxu0 0.0
    %253 = vmatpush1.msra.mxu0 0.0
    %254 = vmatprep.subr.mxu0 0.0
    %255 = vmatpush1.msra.mxu0 0.0
    %256 = vmatprep.mubr.f32.mxu0 0.0
    %257 = vmatmul.mubr.f32.gmra.mrb[0].mxu0 %v187
    %v258 = vpop.f32.mrb[0].mxu0
    %v259 = vadd.f32 0.0, %v258
    %v260 = vpop.f32.mrb[0].mxu0
    %261 = vmatprep.mubr.f32.mxu0 0.0
    %262 = vmatmul.mubr.f32.gmra.mrb[0].mxu0 %v190
    %v263 = vpop.f32.mrb[0].mxu0
    %v264 = vadd.f32 0.0, %v263
    %v265 = vpop.f32.mrb[0].mxu0
    %266 = vdwg.mxu0
    %v267 = vadd.f32 %v175, %v259
    %v268 = vadd.f32 %v176, %v264
    %269 = vst [vmem:[#allocation2] sm:$0xff] %v267
    %270 = vst [vmem:[#allocation2 + $0x8] sm:$0xff] %v268
    // Predicated region
    $region38: #{tpu_custom_call.1} parent=1 // pred_check
      %p271 = pneg %p64
    $region39: #{tpu_custom_call.1} parent=1 // pred_check_branch
      %273 = sbr.rel (%p271) target = $region41
    $region40: #{tpu_custom_call.1} parent=1 // pred_region
      %v274 = vld [vmem:[#allocation2] sm:$0xff]
      %v275 = vld [vmem:[#allocation2 + $0x8] sm:$0xff]
      %v276 = vld [vmem:[%s5] sm:$0x1]
      %v278 = vlaneseq
      %v279 = vshrl.u32 %v278, 7
      %v280 = vsub.s32 0, %v279
      %v281 = vrot.slane %v276, %v280
      %v283 = vadd.f32 %v274, %v281
      %v284 = vadd.f32 %v275, %v281
      %285 = vst [vmem:[#allocation11] sm:$0xff] %v283
      %286 = vst [vmem:[#allocation11 + $0x8] sm:$0xff] %v284
    $region41: #{tpu_custom_call.1} parent=1 // pred_fallthru
      _
    // Predicated region
    $region42: #{tpu_custom_call.1} parent=1 // pred_check
      _
    $region43: #{tpu_custom_call.1} parent=1 // pred_check_branch
      %288 = sbr.rel (0) target = $region45
    $region44: #{tpu_custom_call.1} parent=1 // pred_region
      %s290 = ssub.s32 256, 256
      %291 = vsyncadd [#allocation7], %s290
      %s292 = sshll.u32 [#allocation11], 4
      %s293 = int_to_ptr.vmem [resolvable:$true] %s292
      %298 = dma.vmem_to_hbm [thread:$0]  %s293, 256, %s6, [#allocation7], 128, 128, 8
    $region45: #{tpu_custom_call.1} parent=1 // pred_fallthru
      _
    // Predicated region
    $region46: #{tpu_custom_call.1} parent=1 // pred_check
      _
    $region47: #{tpu_custom_call.1} parent=1 // pred_check_branch
      %300 = sbr.rel (0) target = $region49
    $region48: #{tpu_custom_call.1} parent=1 // pred_region
      %301 = dma.done [#allocation7], 256
    $region49: #{tpu_custom_call.1} parent=1 // pred_fallthru
      _
    %302 = vsyncpa [#allocation6], 1
    %303 = vsyncpa [#allocation9], 1
    %304 = vsyncpa [#allocation7], 1

</llo_original>
